<compile_context>
chip_gen: v5e
topology: v5e:2x2
jax: 0.10.0
libtpu: 0.0.40
codegen_flags: <defaults>
</compile_context>

<pallas_src>
import jax
import jax.numpy as jnp
from jax.experimental import pallas as pl
from jax.experimental.pallas import tpu as pltpu


_LANES = 128            # vreg lane width
_SUBLANES = 8           # f32 sublanes per vreg
_MAX_TILE_ROWS = 4096   # 4096 rows * 128 lanes = 512K batch elems / grid step
_MIN_PALLAS_BATCH = 1024  # below this, plain XLA is faster than pallas_call overhead


def _round_up(a, b):
    return ((a + b - 1) // b) * b


def linear_kernel(params_ref, x_ref, o_ref):
    # params_ref: SMEM (3,) f32 = [w0, w1, b]       (scalar prefetch)
    # x_ref:      VMEM (2, TR, 128) column planes   (batch dense on sublanes + lanes)
    # o_ref:      VMEM (TR, 128)    dense output slab (full-vreg unmasked stores)
    w0 = params_ref[0]
    w1 = params_ref[1]
    b = params_ref[2]
    o_ref[...] = (x_ref[0] * w0 + x_ref[1] * w1 + b).astype(o_ref.dtype)


def linear_forward(x, weight, bias):
    """x: (B, 2) f32, weight: (1, 2) f32, bias: (1,) f32 -> (B, 1) f32"""
    B, IN = x.shape
    OUT = weight.shape[0]
    assert IN == 2 and OUT == 1

    # Small-batch fallback: pallas_call fixed cost + layout plumbing dominate at tiny B.
    if B < _MIN_PALLAS_BATCH:
        return x @ weight.T + bias

    # --- tiling -------------------------------------------------------------
    nr_data = pl.cdiv(B, _LANES)                       # rows of 128 batch elements
    tr = min(_MAX_TILE_ROWS, _round_up(nr_data, _SUBLANES))
    steps = pl.cdiv(nr_data, tr)
    if steps > 1 and steps % 2 == 1:
        steps += 1                                     # even grid -> balanced v7x megacore
    nr = steps * tr
    b_pad = nr * _LANES

    # --- layout plumbing: one fused pad + transpose pass --------------------
    # (b_pad, 2) -> (2, b_pad) -> (2, nr, 128): two dense column planes.
    x_planes = jnp.pad(x, ((0, b_pad - B), (0, 0))).T.reshape(IN, nr, _LANES)

    # [w0, w1, b] scalars for SMEM scalar prefetch.
    params = jnp.concatenate([weight.reshape(-1), bias.reshape(-1)]).astype(jnp.float32)

    out = pl.pallas_call(
        linear_kernel,
        out_shape=jax.ShapeDtypeStruct((nr, _LANES), x.dtype),
        grid_spec=pltpu.PrefetchScalarGridSpec(
            num_scalar_prefetch=1,                     # params -> SMEM, first kernel arg
            grid=(steps,),
            in_specs=[pl.BlockSpec((IN, tr, _LANES), lambda i, p: (0, i, 0))],
            out_specs=pl.BlockSpec((tr, _LANES), lambda i, p: (i, 0)),
        ),
        compiler_params=pltpu.CompilerParams(
            dimension_semantics=("parallel",),         # batch tiles are independent
            vmem_limit_bytes=32 * 1024 * 1024,
        ),
        cost_estimate=pl.CostEstimate(
            flops=4 * b_pad,                           # 2 mul + 2 add per output element
            bytes_accessed=3 * b_pad * 4 + 12,         # 2 planes in + 1 slab out + params
            transcendentals=0,
        ),
    )(params, x_planes)

    # Padded lanes evaluate to `b`, not 0 — they are sliced off here; never reduce over
    # the padded slab upstream of this slice.
    # Batch-major dense slab -> (B, 1): metadata reshape + tiny slice, no transpose pass.
    return out.reshape(-1)[:B][:, None]


if __name__ == "__main__":
    key = jax.random.PRNGKey(0)
    kx, kw, kb, kx2, kx3 = jax.random.split(key, 5)

    IN, OUT = 2, 1
    # Module shapes: nn.Linear(2, 1) -> weight (1, 2), bias (1,)
    weight = jax.random.normal(kw, (OUT, IN), dtype=jnp.float32) * 0.5
    bias = jax.random.normal(kb, (OUT,), dtype=jnp.float32) * 0.1

    # 1) Module-scale small batch: exercises the XLA fallback path.
    x_small = jax.random.normal(kx, (8, IN), dtype=jnp.float32)
    y_small = jax.block_until_ready(linear_forward(x_small, weight, bias))
    assert y_small.shape == (8, OUT)
    assert jnp.allclose(y_small, x_small @ weight.T + bias, atol=1e-5, rtol=1e-5)

    # 2) Larger (still quick) batch: exercises the Pallas kernel path, aligned case.
    B_big = 16384
    x_big = jax.random.normal(kx2, (B_big, IN), dtype=jnp.float32)
    y_big = jax.block_until_ready(linear_forward(x_big, weight, bias))
    assert y_big.shape == (B_big, OUT)
    assert jnp.allclose(y_big, x_big @ weight.T + bias, atol=1e-5, rtol=1e-5)

    # 3) Non-aligned batch: exercises the Pallas kernel path with padding.
    B_odd = 5000
    x_odd = jax.random.normal(kx3, (B_odd, IN), dtype=jnp.float32)
    y_odd = jax.block_until_ready(linear_forward(x_odd, weight, bias))
    assert y_odd.shape == (B_odd, OUT)
    assert jnp.allclose(y_odd, x_odd @ weight.T + bias, atol=1e-5, rtol=1e-5)

    print("KERNEL_OK")
</pallas_src>

<mosaic_0001>
module attributes {stable_mosaic.version = 11 : i64} {
  func.func @linear_kernel(%arg0: i32, %arg1: memref<3xf32, #tpu.memory_space<smem>>, %arg2: memref<2x128x128xf32, #tpu.memory_space<vmem>>, %arg3: memref<128x128xf32, #tpu.memory_space<vmem>>) attributes {dimension_semantics = [#tpu.dimension_semantics<parallel>], iteration_bounds = array<i64: 1>, scalar_prefetch = 1 : i64, scratch_operands = 0 : i64, tpu.core_type = #tpu.core_type<tc>, window_params = [{transform_indices = @transform_0, window_bounds = array<i64: 2, 128, 128>}, {transform_indices = @transform_1, window_bounds = array<i64: 128, 128>}]} {
    %c0 = arith.constant 0 : index
    %0 = memref.load %arg1[%c0] : memref<3xf32, #tpu.memory_space<smem>>
    %c1 = arith.constant 1 : index
    %1 = memref.load %arg1[%c1] : memref<3xf32, #tpu.memory_space<smem>>
    %c2 = arith.constant 2 : index
    %2 = memref.load %arg1[%c2] : memref<3xf32, #tpu.memory_space<smem>>
    %c0_0 = arith.constant 0 : index
    %c0_1 = arith.constant 0 : index
    %c0_2 = arith.constant 0 : index
    %3 = vector.load %arg2[%c0_0, %c0_1, %c0_2] : memref<2x128x128xf32, #tpu.memory_space<vmem>>, vector<1x128x128xf32>
    %4 = vector.shape_cast %3 : vector<1x128x128xf32> to vector<128x128xf32>
    %5 = vector.broadcast %0 : f32 to vector<128x128xf32>
    %6 = arith.mulf %4, %5 : vector<128x128xf32>
    %c1_3 = arith.constant 1 : index
    %c0_4 = arith.constant 0 : index
    %c0_5 = arith.constant 0 : index
    %7 = vector.load %arg2[%c1_3, %c0_4, %c0_5] : memref<2x128x128xf32, #tpu.memory_space<vmem>>, vector<1x128x128xf32>
    %8 = vector.shape_cast %7 : vector<1x128x128xf32> to vector<128x128xf32>
    %9 = vector.broadcast %1 : f32 to vector<128x128xf32>
    %10 = arith.mulf %8, %9 : vector<128x128xf32>
    %11 = arith.addf %6, %10 : vector<128x128xf32>
    %12 = vector.broadcast %2 : f32 to vector<128x128xf32>
    %13 = arith.addf %11, %12 : vector<128x128xf32>
    %c0_6 = arith.constant 0 : index
    %c0_7 = arith.constant 0 : index
    %14 = vector.load %arg3[%c0_6, %c0_7] : memref<128x128xf32, #tpu.memory_space<vmem>>, vector<128x128xf32>
    tpu.vector_store %arg3[%c0_6, %c0_7], %13 {strides = array<i32>} : memref<128x128xf32, #tpu.memory_space<vmem>>, vector<128x128xf32>,
    return
  }
  func.func @transform_0(%arg0: i32, %arg1: memref<3xf32, #tpu.memory_space<smem>>) -> (i32, i32, i32) {
    %c0_i32 = arith.constant 0 : i32
    %c0_i32_0 = arith.constant 0 : i32
    %c0_i32_1 = arith.constant 0 : i32
    return %c0_i32, %arg0, %c0_i32_0 : i32, i32, i32
  }
  func.func @transform_1(%arg0: i32, %arg1: memref<3xf32, #tpu.memory_space<smem>>) -> (i32, i32) {
    %c0_i32 = arith.constant 0 : i32
    %c0_i32_0 = arith.constant 0 : i32
    return %arg0, %c0_i32 : i32, i32
  }
}

</mosaic_0001>

<llo_original>
// kernel: tpu_custom_call.1
$region0: #{tpu_custom_call.1}
  #allocation0 [shape = 'u32[]', space=smem, size = 0x4, offset = 0x4, fixed_abs, tag = 'smem constant byte address 0x4 - core index']
  #allocation1 [shape = 'u32[72,128]{1,0:T(1,128)}', space=vmem, size = 0x9000, scoped, tag = 'internal scratch']
  #allocation2 [shape = 's32[1]{0}', space=sflag, size = 0x4, scoped, tag = 'scoped memory for tpu_custom_call.1']
  #allocation3 [shape = 'u8[512]{0}', space=smem, size = 0x200, scoped, tag = 'prefetched SMEM operand 0']
  %s0 = inlined_call_operand.hbm [shape: f32[3], index: 0, kind: input, shape index: {}]
  %s1 = inlined_call_operand.hbm [shape: f32[2,128,128], index: 1, kind: input, shape index: {}]
  %s2 = inlined_call_operand.hbm [shape: f32[128,128], index: 2, kind: output, shape index: {}]
  %s3 = sld [smem:[#allocation0]]
  $region18: #{tpu_custom_call.1} parent=0
    _
  %s5 = ssub.s32 1, %s3
  %s6 = scalar_select 0, %s5, %s3
  %s8 = sshll.u32 %s0, 4
  %s9 = int_to_ptr.hbm [resolvable:$true] %s8
  %11 = dma.hbm_to_smem %s9, 16, [#allocation3], [#allocation2]
  %13 = dma.done [#allocation2], 16
  %14 = sfence
  $region1: #{tpu_custom_call.1} parent=0
    #allocation4 [shape = 'u8[131072]{0}', space=vmem, size = 0x20000, scoped, tag = 'input window, operand 1, single buffered']
    #allocation5 [shape = 's32[1]{0}', space=sflag, size = 0x4, scoped, tag = 'scoped memory for tpu_custom_call.1']
    #allocation6 [shape = 's32[1]{0}', space=sflag, size = 0x4, scoped, tag = 'scoped memory for tpu_custom_call.1']
    #allocation7 [shape = 'u8[65536]{0}', space=vmem, size = 0x10000, scoped, tag = 'output window, operand 0, single buffered']
    %15 = vsyncpa [#allocation5], 0
    %16 = vsyncpa [#allocation6], 0
    // Predicated region
    $region2: #{tpu_custom_call.1} parent=1 // pred_check
      _
    $region3: #{tpu_custom_call.1} parent=1 // pred_check_branch
      %18 = sbr.rel (0) target = $region5
    $region4: #{tpu_custom_call.1} parent=1 // pred_region
      %20 = vsyncadd [#allocation5], 0
      %s21 = sshll.u32 %s1, 4
      %s22 = int_to_ptr.hbm [resolvable:$true] %s21
      %s23 = sshll.u32 [#allocation4], 4
      %s24 = int_to_ptr.vmem [resolvable:$true] %s23
      %29 = dma.hbm_to_vmem [thread:$0]  %s22, 4096, %s24, [#allocation5], 128, 128, 8
    $region5: #{tpu_custom_call.1} parent=1 // pred_fallthru
      _
    // Predicated region
    $region6: #{tpu_custom_call.1} parent=1 // pred_check
      _
    $region7: #{tpu_custom_call.1} parent=1 // pred_check_branch
      %31 = sbr.rel (0) target = $region9
    $region8: #{tpu_custom_call.1} parent=1 // pred_region
      %33 = dma.done [#allocation5], 4096
    $region9: #{tpu_custom_call.1} parent=1 // pred_fallthru
      _
    %s34 = sld [smem:[#allocation3]]
    %s35 = sld [smem:[#allocation3 + $0x1]]
    %s36 = sld [smem:[#allocation3 + $0x2]]
    %v37 = vld [vmem:[#allocation4] sm:$0xff]
    %v38 = vld [vmem:[#allocation4 + $0x8] sm:$0xff]
    %v39 = vld [vmem:[#allocation4 + $0x10] sm:$0xff]
    %v40 = vld [vmem:[#allocation4 + $0x18] sm:$0xff]
    %v41 = vld [vmem:[#allocation4 + $0x20] sm:$0xff]
    %v42 = vld [vmem:[#allocation4 + $0x28] sm:$0xff]
    %v43 = vld [vmem:[#allocation4 + $0x30] sm:$0xff]
    %v44 = vld [vmem:[#allocation4 + $0x38] sm:$0xff]
    %v45 = vld [vmem:[#allocation4 + $0x40] sm:$0xff]
    %v46 = vld [vmem:[#allocation4 + $0x48] sm:$0xff]
    %v47 = vld [vmem:[#allocation4 + $0x50] sm:$0xff]
    %v48 = vld [vmem:[#allocation4 + $0x58] sm:$0xff]
    %v49 = vld [vmem:[#allocation4 + $0x60] sm:$0xff]
    %v50 = vld [vmem:[#allocation4 + $0x68] sm:$0xff]
    %v51 = vld [vmem:[#allocation4 + $0x70] sm:$0xff]
    %v52 = vld [vmem:[#allocation4 + $0x78] sm:$0xff]
    %v53 = vstv %s34
    %v54 = vmul.f32 %v37, %v53
    %v55 = vmul.f32 %v38, %v53
    %v56 = vmul.f32 %v39, %v53
    %v57 = vmul.f32 %v40, %v53
    %v58 = vmul.f32 %v41, %v53
    %v59 = vmul.f32 %v42, %v53
    %v60 = vmul.f32 %v43, %v53
    %v61 = vmul.f32 %v44, %v53
    %v62 = vmul.f32 %v45, %v53
    %v63 = vmul.f32 %v46, %v53
    %v64 = vmul.f32 %v47, %v53
    %v65 = vmul.f32 %v48, %v53
    %v66 = vmul.f32 %v49, %v53
    %v67 = vmul.f32 %v50, %v53
    %v68 = vmul.f32 %v51, %v53
    %v69 = vmul.f32 %v52, %v53
    %s70 = scalar_lea.vmem [#allocation4], 128
    %v71 = vld [vmem:[%s70] sm:$0xff]
    %v72 = vld [vmem:[%s70 + $0x8] sm:$0xff]
    %v73 = vld [vmem:[%s70 + $0x10] sm:$0xff]
    %v74 = vld [vmem:[%s70 + $0x18] sm:$0xff]
    %v75 = vld [vmem:[%s70 + $0x20] sm:$0xff]
    %v76 = vld [vmem:[%s70 + $0x28] sm:$0xff]
    %v77 = vld [vmem:[%s70 + $0x30] sm:$0xff]
    %v78 = vld [vmem:[%s70 + $0x38] sm:$0xff]
    %v79 = vld [vmem:[%s70 + $0x40] sm:$0xff]
    %v80 = vld [vmem:[%s70 + $0x48] sm:$0xff]
    %v81 = vld [vmem:[%s70 + $0x50] sm:$0xff]
    %v82 = vld [vmem:[%s70 + $0x58] sm:$0xff]
    %v83 = vld [vmem:[%s70 + $0x60] sm:$0xff]
    %v84 = vld [vmem:[%s70 + $0x68] sm:$0xff]
    %v85 = vld [vmem:[%s70 + $0x70] sm:$0xff]
    %v86 = vld [vmem:[%s70 + $0x78] sm:$0xff]
    %v87 = vstv %s35
    %v88 = vmul.f32 %v71, %v87
    %v89 = vmul.f32 %v72, %v87
    %v90 = vmul.f32 %v73, %v87
    %v91 = vmul.f32 %v74, %v87
    %v92 = vmul.f32 %v75, %v87
    %v93 = vmul.f32 %v76, %v87
    %v94 = vmul.f32 %v77, %v87
    %v95 = vmul.f32 %v78, %v87
    %v96 = vmul.f32 %v79, %v87
    %v97 = vmul.f32 %v80, %v87
    %v98 = vmul.f32 %v81, %v87
    %v99 = vmul.f32 %v82, %v87
    %v100 = vmul.f32 %v83, %v87
    %v101 = vmul.f32 %v84, %v87
    %v102 = vmul.f32 %v85, %v87
    %v103 = vmul.f32 %v86, %v87
    %v104 = vadd.f32 %v54, %v88
    %v105 = vadd.f32 %v55, %v89
    %v106 = vadd.f32 %v56, %v90
    %v107 = vadd.f32 %v57, %v91
    %v108 = vadd.f32 %v58, %v92
    %v109 = vadd.f32 %v59, %v93
    %v110 = vadd.f32 %v60, %v94
    %v111 = vadd.f32 %v61, %v95
    %v112 = vadd.f32 %v62, %v96
    %v113 = vadd.f32 %v63, %v97
    %v114 = vadd.f32 %v64, %v98
    %v115 = vadd.f32 %v65, %v99
    %v116 = vadd.f32 %v66, %v100
    %v117 = vadd.f32 %v67, %v101
    %v118 = vadd.f32 %v68, %v102
    %v119 = vadd.f32 %v69, %v103
    %v120 = vstv %s36
    %v121 = vadd.f32 %v104, %v120
    %v122 = vadd.f32 %v105, %v120
    %v123 = vadd.f32 %v106, %v120
    %v124 = vadd.f32 %v107, %v120
    %v125 = vadd.f32 %v108, %v120
    %v126 = vadd.f32 %v109, %v120
    %v127 = vadd.f32 %v110, %v120
    %v128 = vadd.f32 %v111, %v120
    %v129 = vadd.f32 %v112, %v120
    %v130 = vadd.f32 %v113, %v120
    %v131 = vadd.f32 %v114, %v120
    %v132 = vadd.f32 %v115, %v120
    %v133 = vadd.f32 %v116, %v120
    %v134 = vadd.f32 %v117, %v120
    %v135 = vadd.f32 %v118, %v120
    %v136 = vadd.f32 %v119, %v120
    %137 = vst [vmem:[#allocation7] sm:$0xff] %v121
    %138 = vst [vmem:[#allocation7 + $0x8] sm:$0xff] %v122
    %139 = vst [vmem:[#allocation7 + $0x10] sm:$0xff] %v123
    %140 = vst [vmem:[#allocation7 + $0x18] sm:$0xff] %v124
    %141 = vst [vmem:[#allocation7 + $0x20] sm:$0xff] %v125
    %142 = vst [vmem:[#allocation7 + $0x28] sm:$0xff] %v126
    %143 = vst [vmem:[#allocation7 + $0x30] sm:$0xff] %v127
    %144 = vst [vmem:[#allocation7 + $0x38] sm:$0xff] %v128
    %145 = vst [vmem:[#allocation7 + $0x40] sm:$0xff] %v129
    %146 = vst [vmem:[#allocation7 + $0x48] sm:$0xff] %v130
    %147 = vst [vmem:[#allocation7 + $0x50] sm:$0xff] %v131
    %148 = vst [vmem:[#allocation7 + $0x58] sm:$0xff] %v132
    %149 = vst [vmem:[#allocation7 + $0x60] sm:$0xff] %v133
    %150 = vst [vmem:[#allocation7 + $0x68] sm:$0xff] %v134
    %151 = vst [vmem:[#allocation7 + $0x70] sm:$0xff] %v135
    %152 = vst [vmem:[#allocation7 + $0x78] sm:$0xff] %v136
    // Predicated region
    $region10: #{tpu_custom_call.1} parent=1 // pred_check
      _
    $region11: #{tpu_custom_call.1} parent=1 // pred_check_branch
      %154 = sbr.rel (0) target = $region13
    $region12: #{tpu_custom_call.1} parent=1 // pred_region
      %156 = vsyncadd [#allocation6], 0
      %s157 = sshll.u32 [#allocation7], 4
      %s158 = int_to_ptr.vmem [resolvable:$true] %s157
      %s159 = sshll.u32 %s2, 4
      %s160 = int_to_ptr.hbm [resolvable:$true] %s159
      %165 = dma.vmem_to_hbm [thread:$0]  %s158, 2048, %s160, [#allocation6], 128, 128, 8
    $region13: #{tpu_custom_call.1} parent=1 // pred_fallthru
      _
    // Predicated region
    $region14: #{tpu_custom_call.1} parent=1 // pred_check
      _
    $region15: #{tpu_custom_call.1} parent=1 // pred_check_branch
      %167 = sbr.rel (0) target = $region17
    $region16: #{tpu_custom_call.1} parent=1 // pred_region
      %169 = dma.done [#allocation6], 2048
    $region17: #{tpu_custom_call.1} parent=1 // pred_fallthru
      _
    %170 = vsyncpa [#allocation5], 1
    %171 = vsyncpa [#allocation6], 1

</llo_original>
